<compile_context>
chip_gen: v7x
topology: tpu7x:2x2x1
jax: 0.10.0
libtpu: 0.0.40
codegen_flags: <defaults>
</compile_context>

<pallas_src>
import jax
import jax.numpy as jnp
from jax.experimental import pallas as pl
from jax.experimental.pallas import tpu as pltpu


def _normalize_kernel(scale_ref, bias_ref, x_ref, o_ref):
    """x_ref: (nb, C, H, Wt) f32; o_ref: (nb, C, Wt, H) f32.

    scale_ref / bias_ref: (C, 1, 1) f32 in VMEM (constant across the grid).
    One batched minor-dim transpose (XLU), then one fused multiply-add (VPU).
    """
    xt = jnp.transpose(x_ref[...], (0, 1, 3, 2))          # (nb, C, Wt, H)
    o_ref[...] = xt * scale_ref[...] + bias_ref[...]       # (C,1,1) broadcast


def _pick_tiles(n, c, h, w, dtype_bytes=4, budget_bytes=8 * 1024 * 1024):
    """Choose (n_blk, w_t) so one block stays under `budget_bytes`.

    * Whole frame fits           -> w_t = W, fold up to 8 frames per block
                                    (tiny inputs run as one grid step / DMA).
    * Otherwise                  -> w_t = largest multiple of 128 that fits;
                                    grid uses pl.cdiv so w_t need not divide W
                                    (boundary blocks are padded; safe because
                                    the op is elementwise per block).
    # Note: for pathologically tall frames (C*H*128*4 > budget) the block can
    # exceed the budget; H-tiling (multiples of 128 on the output lane axis)
    # would be the next refinement and is not needed for realistic frames.
    """
    frame_bytes = c * h * w * dtype_bytes
    if frame_bytes <= budget_bytes:
        n_blk = max(1, min(n, budget_bytes // frame_bytes, 8))
        return n_blk, w
    col_bytes = c * h * 128 * dtype_bytes            # one 128-wide W strip
    w_t = max(1, budget_bytes // col_bytes) * 128
    w_t = max(128, min(w, w_t))
    return 1, w_t


def normalize_pallas(frames, mean, std):
    """frames: (N, 3, H, W) or (3, H, W) float32 -> (N, 3, W, H) float32."""
    frames = jnp.asarray(frames, jnp.float32)
    if frames.ndim < 4:
        frames = frames[None]                        # unsqueeze(0), JAX glue
    n, c, h, w = frames.shape

    mean = jnp.asarray(mean, dtype=jnp.float32).reshape(c, 1, 1)
    std = jnp.asarray(std, dtype=jnp.float32).reshape(c, 1, 1)
    # strength-reduce the per-element divide: (x - m) / s == x*(1/s) + (-m/s)
    scale = 1.0 / std                                 # (C, 1, 1)
    bias = -mean * scale                              # (C, 1, 1)

    n_blk, w_t = _pick_tiles(n, c, h, w)
    grid = (pl.cdiv(n, n_blk), pl.cdiv(w, w_t))       # tiled spatial axis last

    nbytes = n * c * h * w * 4
    cost = pl.CostEstimate(flops=2 * n * c * h * w,
                           transcendentals=0,
                           bytes_accessed=2 * nbytes)  # read + write, f32

    return pl.pallas_call(
        _normalize_kernel,
        out_shape=jax.ShapeDtypeStruct((n, c, w, h), jnp.float32),
        grid=grid,
        in_specs=[
            # per-channel affine constants: one tiny VMEM fetch, constant map
            pl.BlockSpec((c, 1, 1), lambda i, wi: (0, 0, 0)),
            pl.BlockSpec((c, 1, 1), lambda i, wi: (0, 0, 0)),
            pl.BlockSpec((n_blk, c, h, w_t), lambda i, wi: (i, 0, 0, wi)),
        ],
        out_specs=pl.BlockSpec((n_blk, c, w_t, h), lambda i, wi: (i, 0, wi, 0)),
        compiler_params=pltpu.CompilerParams(
            dimension_semantics=("parallel", "parallel"),
            vmem_limit_bytes=40 * 1024 * 1024,        # 4 x 8 MiB blocks + slack
        ),
        cost_estimate=cost,
    )(scale, bias, frames)


if __name__ == "__main__":
    # deterministic "parameters" from the module's __init__ (per-RGB mean/std)
    mean = (0.485, 0.456, 0.406)
    std = (0.229, 0.224, 0.225)

    key = jax.random.PRNGKey(0)
    # small shapes consistent with the forward: batch=2, channels=3, 16x16
    x = jax.random.uniform(key, (2, 3, 16, 16), dtype=jnp.float32)

    out = jax.block_until_ready(normalize_pallas(x, mean, std))

    # reference in plain JAX: permute(0,1,3,2) then per-channel normalize
    xt = jnp.transpose(x, (0, 1, 3, 2))
    m = jnp.asarray(mean, jnp.float32)[None, :, None, None]
    s = jnp.asarray(std, jnp.float32)[None, :, None, None]
    ref = (xt - m) / s

    assert out.shape == (2, 3, 16, 16)
    # reciprocal-multiply vs true divide differs by ~1 ulp -> 1e-5 tolerance
    assert jnp.allclose(out, ref, atol=1e-5, rtol=1e-5), \
        float(jnp.max(jnp.abs(out - ref)))

    print("KERNEL_OK")
</pallas_src>

<mosaic_0001>
module attributes {stable_mosaic.version = 11 : i64} {
  func.func @_normalize_kernel(%arg0: i32, %arg1: i32, %arg2: memref<3x1x1xf32, #tpu.memory_space<vmem>>, %arg3: memref<3x1x1xf32, #tpu.memory_space<vmem>>, %arg4: memref<2x3x16x16xf32, #tpu.memory_space<vmem>>, %arg5: memref<2x3x16x16xf32, #tpu.memory_space<vmem>>) attributes {dimension_semantics = [#tpu.dimension_semantics<parallel>, #tpu.dimension_semantics<parallel>], iteration_bounds = array<i64: 1, 1>, scalar_prefetch = 0 : i64, scratch_operands = 0 : i64, tpu.core_type = #tpu.core_type<tc>, window_params = [{pipeline_mode = #tpu.pipeline_mode<synchronous>, transform_indices = @transform_0, window_bounds = array<i64: 3, 1, 1>}, {pipeline_mode = #tpu.pipeline_mode<synchronous>, transform_indices = @transform_1, window_bounds = array<i64: 3, 1, 1>}, {transform_indices = @transform_2, window_bounds = array<i64: 2, 3, 16, 16>}, {transform_indices = @transform_3, window_bounds = array<i64: 2, 3, 16, 16>}]} {
    %c0 = arith.constant 0 : index
    %c0_0 = arith.constant 0 : index
    %c0_1 = arith.constant 0 : index
    %c0_2 = arith.constant 0 : index
    %0 = vector.load %arg4[%c0, %c0_0, %c0_1, %c0_2] : memref<2x3x16x16xf32, #tpu.memory_space<vmem>>, vector<2x3x16x16xf32>
    %1 = tpu.transpose %0, [0, 1, 3, 2] : vector<2x3x16x16xf32> -> vector<2x3x16x16xf32>
    %c0_3 = arith.constant 0 : index
    %c0_4 = arith.constant 0 : index
    %c0_5 = arith.constant 0 : index
    %2 = vector.load %arg2[%c0_3, %c0_4, %c0_5] : memref<3x1x1xf32, #tpu.memory_space<vmem>>, vector<3x1x1xf32>
    %3 = vector.shape_cast %2 : vector<3x1x1xf32> to vector<1x3x1x1xf32>
    %4 = vector.broadcast %3 : vector<1x3x1x1xf32> to vector<2x3x16x16xf32>
    %5 = arith.mulf %1, %4 : vector<2x3x16x16xf32>
    %c0_6 = arith.constant 0 : index
    %c0_7 = arith.constant 0 : index
    %c0_8 = arith.constant 0 : index
    %6 = vector.load %arg3[%c0_6, %c0_7, %c0_8] : memref<3x1x1xf32, #tpu.memory_space<vmem>>, vector<3x1x1xf32>
    %7 = vector.shape_cast %6 : vector<3x1x1xf32> to vector<1x3x1x1xf32>
    %8 = vector.broadcast %7 : vector<1x3x1x1xf32> to vector<2x3x16x16xf32>
    %9 = arith.addf %5, %8 : vector<2x3x16x16xf32>
    %c0_9 = arith.constant 0 : index
    %c0_10 = arith.constant 0 : index
    %c0_11 = arith.constant 0 : index
    %c0_12 = arith.constant 0 : index
    %10 = vector.load %arg5[%c0_9, %c0_10, %c0_11, %c0_12] : memref<2x3x16x16xf32, #tpu.memory_space<vmem>>, vector<2x3x16x16xf32>
    tpu.vector_store %arg5[%c0_9, %c0_10, %c0_11, %c0_12], %9 {strides = array<i32>} : memref<2x3x16x16xf32, #tpu.memory_space<vmem>>, vector<2x3x16x16xf32>,
    return
  }
  func.func @transform_0(%arg0: i32, %arg1: i32) -> (i32, i32, i32) {
    %c0_i32 = arith.constant 0 : i32
    %c0_i32_0 = arith.constant 0 : i32
    %c0_i32_1 = arith.constant 0 : i32
    %c0_i32_2 = arith.constant 0 : i32
    return %c0_i32, %c0_i32_0, %c0_i32_1 : i32, i32, i32
  }
  func.func @transform_1(%arg0: i32, %arg1: i32) -> (i32, i32, i32) {
    %c0_i32 = arith.constant 0 : i32
    %c0_i32_0 = arith.constant 0 : i32
    %c0_i32_1 = arith.constant 0 : i32
    %c0_i32_2 = arith.constant 0 : i32
    return %c0_i32, %c0_i32_0, %c0_i32_1 : i32, i32, i32
  }
  func.func @transform_2(%arg0: i32, %arg1: i32) -> (i32, i32, i32, i32) {
    %c0_i32 = arith.constant 0 : i32
    %c0_i32_0 = arith.constant 0 : i32
    %c0_i32_1 = arith.constant 0 : i32
    return %arg0, %c0_i32, %c0_i32_0, %arg1 : i32, i32, i32, i32
  }
  func.func @transform_3(%arg0: i32, %arg1: i32) -> (i32, i32, i32, i32) {
    %c0_i32 = arith.constant 0 : i32
    %c0_i32_0 = arith.constant 0 : i32
    %c0_i32_1 = arith.constant 0 : i32
    return %arg0, %c0_i32, %arg1, %c0_i32_0 : i32, i32, i32, i32
  }
}

</mosaic_0001>

<llo_original>
// kernel: tpu_custom_call.1
$region0: #{tpu_custom_call.1}
  #allocation0 [shape = 'u32[]', space=smem, size = 0x4, offset = 0x4, fixed_abs, tag = 'smem constant byte address 0x4 - core index']
  #allocation1 [shape = 'u32[144,128]{1,0:T(1,128)}', space=vmem, size = 0x12000, scoped, tag = 'internal scratch']
  %s0 = inlined_call_operand.vmem [shape: f32[3,1,1], index: 0, kind: input, shape index: {}]
  %s1 = inlined_call_operand.vmem [shape: f32[3,1,1], index: 1, kind: input, shape index: {}]
  %s2 = inlined_call_operand.hbm [shape: f32[2,3,16,16], index: 2, kind: input, shape index: {}]
  %s3 = inlined_call_operand.hbm [shape: f32[2,3,16,16], index: 3, kind: output, shape index: {}]
  %s4 = sld [smem:[#allocation0]]
  $region26: #{tpu_custom_call.1} parent=0
    _
  %s6 = ssub.s32 1, %s4
  %s7 = scalar_select 0, %s6, %s4
  $region1: #{tpu_custom_call.1} parent=0
    #allocation2 [shape = 'u8[49152]{0}', space=vmem, size = 0xc000, scoped, tag = 'input window, operand 2, single buffered']
    #allocation3 [shape = 's32[1]{0}', space=sflag, size = 0x4, scoped, tag = 'scoped memory for tpu_custom_call.1']
    #allocation4 [shape = 's32[1]{0}', space=sflag, size = 0x4, scoped, tag = 'scoped memory for tpu_custom_call.1']
    #allocation5 [shape = 'u8[49152]{0}', space=vmem, size = 0xc000, scoped, tag = 'output window, operand 0, single buffered']
    %8 = vsyncpa [#allocation3], 0
    %9 = vsyncpa [#allocation4], 0
    // Predicated region
    $region2: #{tpu_custom_call.1} parent=1 // pred_check
      _
    $region3: #{tpu_custom_call.1} parent=1 // pred_check_branch
      %11 = sbr.rel (0) target = $region5
    $region4: #{tpu_custom_call.1} parent=1 // pred_region
      _
    $region5: #{tpu_custom_call.1} parent=1 // pred_fallthru
      _
    // Predicated region
    $region6: #{tpu_custom_call.1} parent=1 // pred_check
      _
    $region7: #{tpu_custom_call.1} parent=1 // pred_check_branch
      %13 = sbr.rel (0) target = $region9
    $region8: #{tpu_custom_call.1} parent=1 // pred_region
      _
    $region9: #{tpu_custom_call.1} parent=1 // pred_fallthru
      _
    // Predicated region
    $region10: #{tpu_custom_call.1} parent=1 // pred_check
      _
    $region11: #{tpu_custom_call.1} parent=1 // pred_check_branch
      %15 = sbr.rel (0) target = $region13
    $region12: #{tpu_custom_call.1} parent=1 // pred_region
      %s17 = ssub.s32 1536, 1536
      %18 = vsyncadd [#allocation3], %s17
      %s19 = sshll.u32 [#allocation2], 4
      %s20 = int_to_ptr.vmem [resolvable:$true] %s19
      %25 = dma.hbm_to_vmem [thread:$0]  %s2, 1536, %s20, [#allocation3], 128, 128, 8
    $region13: #{tpu_custom_call.1} parent=1 // pred_fallthru
      _
    // Predicated region
    $region14: #{tpu_custom_call.1} parent=1 // pred_check
      _
    $region15: #{tpu_custom_call.1} parent=1 // pred_check_branch
      %27 = sbr.rel (0) target = $region17
    $region16: #{tpu_custom_call.1} parent=1 // pred_region
      %28 = dma.done [#allocation3], 1536
    $region17: #{tpu_custom_call.1} parent=1 // pred_fallthru
      _
    %v29 = vld [vmem:[#allocation2] sm:$0xff]
    %v30 = vld [vmem:[#allocation2 + $0x8] sm:$0xff]
    %v31 = vld [vmem:[#allocation2 + $0x10] sm:$0xff]
    %v32 = vld [vmem:[#allocation2 + $0x18] sm:$0xff]
    %v33 = vld [vmem:[#allocation2 + $0x20] sm:$0xff]
    %v34 = vld [vmem:[#allocation2 + $0x28] sm:$0xff]
    %v35 = vld [vmem:[#allocation2 + $0x30] sm:$0xff]
    %v36 = vld [vmem:[#allocation2 + $0x38] sm:$0xff]
    %v37 = vld [vmem:[#allocation2 + $0x40] sm:$0xff]
    %v38 = vld [vmem:[#allocation2 + $0x48] sm:$0xff]
    %v39 = vld [vmem:[#allocation2 + $0x50] sm:$0xff]
    %v40 = vld [vmem:[#allocation2 + $0x58] sm:$0xff]
    %41 = vxpose.xlu0.b32.start [1/16] %v29, 128
    %42 = vxpose.xlu0.b32.cont [2/16] %v30, 128
    %43 = vxpose.xlu0.b32.cont [3/16] 0.0, 128
    %44 = vxpose.xlu0.b32.cont [4/16] 0.0, 128
    %45 = vxpose.xlu0.b32.cont [5/16] 0.0, 128
    %46 = vxpose.xlu0.b32.cont [6/16] 0.0, 128
    %47 = vxpose.xlu0.b32.cont [7/16] 0.0, 128
    %48 = vxpose.xlu0.b32.cont [8/16] 0.0, 128
    %49 = vxpose.xlu0.b32.cont [9/16] 0.0, 128
    %50 = vxpose.xlu0.b32.cont [10/16] 0.0, 128
    %51 = vxpose.xlu0.b32.cont [11/16] 0.0, 128
    %52 = vxpose.xlu0.b32.cont [12/16] 0.0, 128
    %53 = vxpose.xlu0.b32.cont [13/16] 0.0, 128
    %54 = vxpose.xlu0.b32.cont [14/16] 0.0, 128
    %55 = vxpose.xlu0.b32.cont [15/16] 0.0, 128
    %56 = vxpose.xlu0.b32.end [16/16] 0.0, 128
    %v57 = vpop.trf.xlu0
    %v58 = vpop.trf.xlu0
    %v59 = vpop.trf.xlu0
    %v60 = vpop.trf.xlu0
    %v61 = vpop.trf.xlu0
    %v62 = vpop.trf.xlu0
    %v63 = vpop.trf.xlu0
    %v64 = vpop.trf.xlu0
    %v65 = vpop.trf.xlu0
    %v66 = vpop.trf.xlu0
    %v67 = vpop.trf.xlu0
    %v68 = vpop.trf.xlu0
    %v69 = vpop.trf.xlu0
    %v70 = vpop.trf.xlu0
    %v71 = vpop.trf.xlu0
    %v72 = vpop.trf.xlu0
    %73 = vxpose.xlu0.b32.start [1/16] %v31, 128
    %74 = vxpose.xlu0.b32.cont [2/16] %v32, 128
    %75 = vxpose.xlu0.b32.cont [3/16] 0.0, 128
    %76 = vxpose.xlu0.b32.cont [4/16] 0.0, 128
    %77 = vxpose.xlu0.b32.cont [5/16] 0.0, 128
    %78 = vxpose.xlu0.b32.cont [6/16] 0.0, 128
    %79 = vxpose.xlu0.b32.cont [7/16] 0.0, 128
    %80 = vxpose.xlu0.b32.cont [8/16] 0.0, 128
    %81 = vxpose.xlu0.b32.cont [9/16] 0.0, 128
    %82 = vxpose.xlu0.b32.cont [10/16] 0.0, 128
    %83 = vxpose.xlu0.b32.cont [11/16] 0.0, 128
    %84 = vxpose.xlu0.b32.cont [12/16] 0.0, 128
    %85 = vxpose.xlu0.b32.cont [13/16] 0.0, 128
    %86 = vxpose.xlu0.b32.cont [14/16] 0.0, 128
    %87 = vxpose.xlu0.b32.cont [15/16] 0.0, 128
    %88 = vxpose.xlu0.b32.end [16/16] 0.0, 128
    %v89 = vpop.trf.xlu0
    %v90 = vpop.trf.xlu0
    %v91 = vpop.trf.xlu0
    %v92 = vpop.trf.xlu0
    %v93 = vpop.trf.xlu0
    %v94 = vpop.trf.xlu0
    %v95 = vpop.trf.xlu0
    %v96 = vpop.trf.xlu0
    %v97 = vpop.trf.xlu0
    %v98 = vpop.trf.xlu0
    %v99 = vpop.trf.xlu0
    %v100 = vpop.trf.xlu0
    %v101 = vpop.trf.xlu0
    %v102 = vpop.trf.xlu0
    %v103 = vpop.trf.xlu0
    %v104 = vpop.trf.xlu0
    %105 = vxpose.xlu0.b32.start [1/16] %v33, 128
    %106 = vxpose.xlu0.b32.cont [2/16] %v34, 128
    %107 = vxpose.xlu0.b32.cont [3/16] 0.0, 128
    %108 = vxpose.xlu0.b32.cont [4/16] 0.0, 128
    %109 = vxpose.xlu0.b32.cont [5/16] 0.0, 128
    %110 = vxpose.xlu0.b32.cont [6/16] 0.0, 128
    %111 = vxpose.xlu0.b32.cont [7/16] 0.0, 128
    %112 = vxpose.xlu0.b32.cont [8/16] 0.0, 128
    %113 = vxpose.xlu0.b32.cont [9/16] 0.0, 128
    %114 = vxpose.xlu0.b32.cont [10/16] 0.0, 128
    %115 = vxpose.xlu0.b32.cont [11/16] 0.0, 128
    %116 = vxpose.xlu0.b32.cont [12/16] 0.0, 128
    %117 = vxpose.xlu0.b32.cont [13/16] 0.0, 128
    %118 = vxpose.xlu0.b32.cont [14/16] 0.0, 128
    %119 = vxpose.xlu0.b32.cont [15/16] 0.0, 128
    %120 = vxpose.xlu0.b32.end [16/16] 0.0, 128
    %v121 = vpop.trf.xlu0
    %v122 = vpop.trf.xlu0
    %v123 = vpop.trf.xlu0
    %v124 = vpop.trf.xlu0
    %v125 = vpop.trf.xlu0
    %v126 = vpop.trf.xlu0
    %v127 = vpop.trf.xlu0
    %v128 = vpop.trf.xlu0
    %v129 = vpop.trf.xlu0
    %v130 = vpop.trf.xlu0
    %v131 = vpop.trf.xlu0
    %v132 = vpop.trf.xlu0
    %v133 = vpop.trf.xlu0
    %v134 = vpop.trf.xlu0
    %v135 = vpop.trf.xlu0
    %v136 = vpop.trf.xlu0
    %137 = vxpose.xlu0.b32.start [1/16] %v35, 128
    %138 = vxpose.xlu0.b32.cont [2/16] %v36, 128
    %139 = vxpose.xlu0.b32.cont [3/16] 0.0, 128
    %140 = vxpose.xlu0.b32.cont [4/16] 0.0, 128
    %141 = vxpose.xlu0.b32.cont [5/16] 0.0, 128
    %142 = vxpose.xlu0.b32.cont [6/16] 0.0, 128
    %143 = vxpose.xlu0.b32.cont [7/16] 0.0, 128
    %144 = vxpose.xlu0.b32.cont [8/16] 0.0, 128
    %145 = vxpose.xlu0.b32.cont [9/16] 0.0, 128
    %146 = vxpose.xlu0.b32.cont [10/16] 0.0, 128
    %147 = vxpose.xlu0.b32.cont [11/16] 0.0, 128
    %148 = vxpose.xlu0.b32.cont [12/16] 0.0, 128
    %149 = vxpose.xlu0.b32.cont [13/16] 0.0, 128
    %150 = vxpose.xlu0.b32.cont [14/16] 0.0, 128
    %151 = vxpose.xlu0.b32.cont [15/16] 0.0, 128
    %152 = vxpose.xlu0.b32.end [16/16] 0.0, 128
    %v153 = vpop.trf.xlu0
    %v154 = vpop.trf.xlu0
    %v155 = vpop.trf.xlu0
    %v156 = vpop.trf.xlu0
    %v157 = vpop.trf.xlu0
    %v158 = vpop.trf.xlu0
    %v159 = vpop.trf.xlu0
    %v160 = vpop.trf.xlu0
    %v161 = vpop.trf.xlu0
    %v162 = vpop.trf.xlu0
    %v163 = vpop.trf.xlu0
    %v164 = vpop.trf.xlu0
    %v165 = vpop.trf.xlu0
    %v166 = vpop.trf.xlu0
    %v167 = vpop.trf.xlu0
    %v168 = vpop.trf.xlu0
    %169 = vxpose.xlu0.b32.start [1/16] %v37, 128
    %170 = vxpose.xlu0.b32.cont [2/16] %v38, 128
    %171 = vxpose.xlu0.b32.cont [3/16] 0.0, 128
    %172 = vxpose.xlu0.b32.cont [4/16] 0.0, 128
    %173 = vxpose.xlu0.b32.cont [5/16] 0.0, 128
    %174 = vxpose.xlu0.b32.cont [6/16] 0.0, 128
    %175 = vxpose.xlu0.b32.cont [7/16] 0.0, 128
    %176 = vxpose.xlu0.b32.cont [8/16] 0.0, 128
    %177 = vxpose.xlu0.b32.cont [9/16] 0.0, 128
    %178 = vxpose.xlu0.b32.cont [10/16] 0.0, 128
    %179 = vxpose.xlu0.b32.cont [11/16] 0.0, 128
    %180 = vxpose.xlu0.b32.cont [12/16] 0.0, 128
    %181 = vxpose.xlu0.b32.cont [13/16] 0.0, 128
    %182 = vxpose.xlu0.b32.cont [14/16] 0.0, 128
    %183 = vxpose.xlu0.b32.cont [15/16] 0.0, 128
    %184 = vxpose.xlu0.b32.end [16/16] 0.0, 128
    %v185 = vpop.trf.xlu0
    %v186 = vpop.trf.xlu0
    %v187 = vpop.trf.xlu0
    %v188 = vpop.trf.xlu0
    %v189 = vpop.trf.xlu0
    %v190 = vpop.trf.xlu0
    %v191 = vpop.trf.xlu0
    %v192 = vpop.trf.xlu0
    %v193 = vpop.trf.xlu0
    %v194 = vpop.trf.xlu0
    %v195 = vpop.trf.xlu0
    %v196 = vpop.trf.xlu0
    %v197 = vpop.trf.xlu0
    %v198 = vpop.trf.xlu0
    %v199 = vpop.trf.xlu0
    %v200 = vpop.trf.xlu0
    %201 = vxpose.xlu0.b32.start [1/16] %v39, 128
    %202 = vxpose.xlu0.b32.cont [2/16] %v40, 128
    %203 = vxpose.xlu0.b32.cont [3/16] 0.0, 128
    %204 = vxpose.xlu0.b32.cont [4/16] 0.0, 128
    %205 = vxpose.xlu0.b32.cont [5/16] 0.0, 128
    %206 = vxpose.xlu0.b32.cont [6/16] 0.0, 128
    %207 = vxpose.xlu0.b32.cont [7/16] 0.0, 128
    %208 = vxpose.xlu0.b32.cont [8/16] 0.0, 128
    %209 = vxpose.xlu0.b32.cont [9/16] 0.0, 128
    %210 = vxpose.xlu0.b32.cont [10/16] 0.0, 128
    %211 = vxpose.xlu0.b32.cont [11/16] 0.0, 128
    %212 = vxpose.xlu0.b32.cont [12/16] 0.0, 128
    %213 = vxpose.xlu0.b32.cont [13/16] 0.0, 128
    %214 = vxpose.xlu0.b32.cont [14/16] 0.0, 128
    %215 = vxpose.xlu0.b32.cont [15/16] 0.0, 128
    %216 = vxpose.xlu0.b32.end [16/16] 0.0, 128
    %v217 = vpop.trf.xlu0
    %v218 = vpop.trf.xlu0
    %v219 = vpop.trf.xlu0
    %v220 = vpop.trf.xlu0
    %v221 = vpop.trf.xlu0
    %v222 = vpop.trf.xlu0
    %v223 = vpop.trf.xlu0
    %v224 = vpop.trf.xlu0
    %v225 = vpop.trf.xlu0
    %v226 = vpop.trf.xlu0
    %v227 = vpop.trf.xlu0
    %v228 = vpop.trf.xlu0
    %v229 = vpop.trf.xlu0
    %v230 = vpop.trf.xlu0
    %v231 = vpop.trf.xlu0
    %v232 = vpop.trf.xlu0
    %v233 = vld [vmem:[%s0] sm:$0x1]
    %v234 = vld [vmem:[%s0 + $0x1] sm:$0x1]
    %v235 = vld [vmem:[%s0 + $0x2] sm:$0x1]
    %v239 = vlaneseq
    %v240 = vshrl.u32 %v239, 7
    %v241 = vsub.s32 0, %v240
    %v242 = vrot.slane %v233, %v241
    %v243 = vlaneseq
    %v244 = vshrl.u32 %v243, 7
    %v245 = vsub.s32 0, %v244
    %v246 = vrot.slane %v234, %v245
    %v247 = vlaneseq
    %v248 = vshrl.u32 %v247, 7
    %v249 = vsub.s32 0, %v248
    %v250 = vrot.slane %v235, %v249
    %251 = vset.pattern.permute.xlu0 0
    %252 = vperm.xlu0 %251, %v242
    %v253 = vpop.permute.xlu0 %252
    %255 = vset.pattern.permute.xlu0 0
    %256 = vperm.xlu0 %255, %v246
    %v257 = vpop.permute.xlu0 %256
    %259 = vset.pattern.permute.xlu0 0
    %260 = vperm.xlu0 %259, %v250
    %v261 = vpop.permute.xlu0 %260
    %v263 = vmul.f32 %v57, %v253
    %v264 = vmul.f32 %v58, %v253
    %v265 = vmul.f32 %v89, %v257
    %v266 = vmul.f32 %v90, %v257
    %v267 = vmul.f32 %v121, %v261
    %v268 = vmul.f32 %v122, %v261
    %v269 = vmul.f32 %v153, %v253
    %v270 = vmul.f32 %v154, %v253
    %v271 = vmul.f32 %v185, %v257
    %v272 = vmul.f32 %v186, %v257
    %v273 = vmul.f32 %v217, %v261
    %v274 = vmul.f32 %v218, %v261
    %v275 = vld [vmem:[%s1] sm:$0x1]
    %v276 = vld [vmem:[%s1 + $0x1] sm:$0x1]
    %v277 = vld [vmem:[%s1 + $0x2] sm:$0x1]
    %v281 = vlaneseq
    %v282 = vshrl.u32 %v281, 7
    %v283 = vsub.s32 0, %v282
    %v284 = vrot.slane %v275, %v283
    %v285 = vlaneseq
    %v286 = vshrl.u32 %v285, 7
    %v287 = vsub.s32 0, %v286
    %v288 = vrot.slane %v276, %v287
    %v289 = vlaneseq
    %v290 = vshrl.u32 %v289, 7
    %v291 = vsub.s32 0, %v290
    %v292 = vrot.slane %v277, %v291
    %293 = vset.pattern.permute.xlu0 0
    %294 = vperm.xlu0 %293, %v284
    %v295 = vpop.permute.xlu0 %294
    %297 = vset.pattern.permute.xlu0 0
    %298 = vperm.xlu0 %297, %v288
    %v299 = vpop.permute.xlu0 %298
    %301 = vset.pattern.permute.xlu0 0
    %302 = vperm.xlu0 %301, %v292
    %v303 = vpop.permute.xlu0 %302
    %v305 = vadd.f32 %v263, %v295
    %v306 = vadd.f32 %v264, %v295
    %v307 = vadd.f32 %v265, %v299
    %v308 = vadd.f32 %v266, %v299
    %v309 = vadd.f32 %v267, %v303
    %v310 = vadd.f32 %v268, %v303
    %v311 = vadd.f32 %v269, %v295
    %v312 = vadd.f32 %v270, %v295
    %v313 = vadd.f32 %v271, %v299
    %v314 = vadd.f32 %v272, %v299
    %v315 = vadd.f32 %v273, %v303
    %v316 = vadd.f32 %v274, %v303
    %vm317 = vcmask 130048
    %318 = vst.msk [vmem:[#allocation5] sm:$0xff] %vm317, %v305
    %319 = vst.msk [vmem:[#allocation5 + $0x8] sm:$0xff] %vm317, %v306
    %320 = vst.msk [vmem:[#allocation5 + $0x10] sm:$0xff] %vm317, %v307
    %321 = vst.msk [vmem:[#allocation5 + $0x18] sm:$0xff] %vm317, %v308
    %322 = vst.msk [vmem:[#allocation5 + $0x20] sm:$0xff] %vm317, %v309
    %323 = vst.msk [vmem:[#allocation5 + $0x28] sm:$0xff] %vm317, %v310
    %324 = vst.msk [vmem:[#allocation5 + $0x30] sm:$0xff] %vm317, %v311
    %325 = vst.msk [vmem:[#allocation5 + $0x38] sm:$0xff] %vm317, %v312
    %326 = vst.msk [vmem:[#allocation5 + $0x40] sm:$0xff] %vm317, %v313
    %327 = vst.msk [vmem:[#allocation5 + $0x48] sm:$0xff] %vm317, %v314
    %328 = vst.msk [vmem:[#allocation5 + $0x50] sm:$0xff] %vm317, %v315
    %329 = vst.msk [vmem:[#allocation5 + $0x58] sm:$0xff] %vm317, %v316
    // Predicated region
    $region18: #{tpu_custom_call.1} parent=1 // pred_check
      _
    $region19: #{tpu_custom_call.1} parent=1 // pred_check_branch
      %331 = sbr.rel (0) target = $region21
    $region20: #{tpu_custom_call.1} parent=1 // pred_region
      %s333 = ssub.s32 1536, 1536
      %334 = vsyncadd [#allocation4], %s333
      %s335 = sshll.u32 [#allocation5], 4
      %s336 = int_to_ptr.vmem [resolvable:$true] %s335
      %341 = dma.vmem_to_hbm [thread:$0]  %s336, 1536, %s3, [#allocation4], 128, 128, 8
    $region21: #{tpu_custom_call.1} parent=1 // pred_fallthru
      _
    // Predicated region
    $region22: #{tpu_custom_call.1} parent=1 // pred_check
      _
    $region23: #{tpu_custom_call.1} parent=1 // pred_check_branch
      %343 = sbr.rel (0) target = $region25
    $region24: #{tpu_custom_call.1} parent=1 // pred_region
      %344 = dma.done [#allocation4], 1536
    $region25: #{tpu_custom_call.1} parent=1 // pred_fallthru
      _
    %345 = vsyncpa [#allocation3], 1
    %346 = vsyncpa [#allocation4], 1

</llo_original>
